<compile_context>
chip_gen: v5e
topology: v5e:2x2
jax: 0.10.0
libtpu: 0.0.40
codegen_flags: <defaults>
</compile_context>

<pallas_src>
import jax
import jax.numpy as jnp
from jax.experimental import pallas as pl
from jax.experimental.pallas import tpu as pltpu


def _round_up(x, m):
    return (x + m - 1) // m * m


def _cdiv(a, b):
    return (a + b - 1) // b


def _vmem_capacity_bytes():
    # 64 MiB is the v7x per-TensorCore size -> safe lower bound if the query
    # is unavailable on this host.
    try:
        return int(pltpu.get_tpu_info().vmem_capacity_bytes)
    except Exception:
        return 64 * 1024 * 1024


# --------------------------------------------------------------------------
# Primary kernel: fused in-kernel gather (P2 scalar prefetch + P4 manual DMA)
# --------------------------------------------------------------------------
def _fused_gather_kernel(desc_ref, w_ref, emb_hbm, o_ref, gbuf, nw_ref, sem):
    # desc_ref: SMEM [B_pad * S] int32   scalar-prefetched token ids
    # w_ref:    VMEM [TB, S] f32         raw per-token weights for this block
    # emb_hbm:  HBM  [V, Dp]             embedding table (never copied whole)
    # o_ref:    VMEM [TB, Dp] f32        weighted-sum document vectors
    # gbuf:     VMEM [2, S, Dp]          double-buffered row-gather scratch
    # nw_ref:   VMEM [TB, S] f32         softmax-normalized weights
    # sem:      DMA sems (2,)            one per gather slot (S copies each)
    TB, Dp = o_ref.shape
    S = w_ref.shape[1]
    row0 = pl.program_id(0) * TB                 # global batch row of block

    def start_row_fetch(row, slot):
        # S independent row gathers: table[desc[row, s]] -> gbuf[slot, s]
        @pl.loop(0, S)
        def _(s):
            tok = desc_ref[(row0 + row) * S + s]
            pltpu.make_async_copy(emb_hbm.at[tok], gbuf.at[slot, s],
                                  sem.at[slot]).start()

    def wait_row_fetch(slot):
        @pl.loop(0, S)
        def _(s):
            # Source only provides the copy size for the wait.
            pltpu.make_async_copy(emb_hbm.at[0], gbuf.at[slot, s],
                                  sem.at[slot]).wait()

    # Prime the pipeline, then compute the softmax while row 0 is in flight.
    start_row_fetch(0, 0)

    w = w_ref[...].astype(jnp.float32)                        # [TB, S]
    m = jnp.max(w, axis=1, keepdims=True)
    p = jnp.exp(w - m)
    denom = jnp.sum(p, axis=1, keepdims=True)
    nw_ref[...] = p * pl.reciprocal(denom, approx=True)       # EUP rcp (~1e-4)

    @pl.loop(0, TB)
    def _(row):
        slot = row & 1
        # Queue the next row's gathers before blocking on this row's, so the
        # DMA engine never idles (that buffer slot was freed two rows ago).
        @pl.when(row + 1 < TB)
        def _():
            start_row_fetch(row + 1, 1 - slot)
        wait_row_fetch(slot)
        # [1,S] x [S,Dp] matvec, f32 accumulation.  Only one row of gathered
        # embeddings is ever live in f32 (no full-tile cast copy).
        g = gbuf[slot].astype(jnp.float32)                     # [S, Dp]
        nwr = nw_ref[pl.ds(row, 1), :]                         # [1, S]
        o_ref[pl.ds(row, 1), :] = jnp.dot(
            nwr, g, preferred_element_type=jnp.float32)


# --------------------------------------------------------------------------
# Fallback kernel (XLA gather outside): only when ids do not fit SMEM.
# --------------------------------------------------------------------------
def _tile_kernel(w_ref, e_ref, o_ref):
    # w_ref: [TB, S] f32, e_ref: [TB, S, Dp], o_ref: [TB, Dp] f32
    w = w_ref[...].astype(jnp.float32)
    m = jnp.max(w, axis=1, keepdims=True)
    p = jnp.exp(w - m)
    denom = jnp.sum(p, axis=1, keepdims=True)
    nw = p * pl.reciprocal(denom, approx=True)
    # Batched MXU contraction over S — no f32 copy of the whole tile and no
    # (TB, S, Dp)-sized nw*e product temporary.
    o_ref[...] = jnp.einsum("bs,bsd->bd", nw.astype(e_ref.dtype), e_ref[...],
                            preferred_element_type=jnp.float32)


def weighted_sum_encoder(desc, embed_table, weight_table,
                         *, min_grid_steps=8, max_rows_per_step=1024):
    """Forward pass of WeightedSumEncoder (use_cnts=False).

    desc:         [B, S] int token ids
    embed_table:  [V, D] word-embedding table (f32 or bf16)
    weight_table: [V, 1] per-token scalar weight table
    returns:      [B, D] f32 document vectors
    """
    # TODO(synk): use_cnts=True branch ((terms, cnts) + log(cnts) bias) is not
    # implemented here.
    desc = desc.astype(jnp.int32)
    B, S = desc.shape
    V, D = embed_table.shape
    esize = jnp.dtype(embed_table.dtype).itemsize

    # ---- cheap upstream padding: table columns only (never [B,S,D]) --------
    Dp = _round_up(D, 128)                       # lane-dense rows / stores
    emb = embed_table if Dp == D else jnp.pad(embed_table, ((0, 0), (0, Dp - D)))

    cap = _vmem_capacity_bytes()

    # Rows per grid step: big enough to amortize per-step overhead, small
    # enough that the "parallel" batch axis has >= min_grid_steps steps so
    # v7x's two TensorCores both get work.
    TB = min(max_rows_per_step, max(8, _round_up(_cdiv(B, min_grid_steps), 8)))

    # Fused-gather path requires (a) ids fit SMEM (scalar prefetch copies the
    # whole id array) and (b) a small double-buffered [2, S, Dp] gather buffer.
    fuse = (B * S * 4 <= 256 * 1024) and (2 * S * Dp * esize <= 16 * 1024 * 1024)

    if not fuse:
        # Fallback: XLA gather + tiled kernel.  Cap TB so the double-buffered
        # (TB, S, Dp) input tile fits a budget sized off this chip's VMEM.
        tile_budget = 3 * cap // 8               # ~24 MiB v7x, ~48 MiB v5e/v6e
        tb_fit = max(1, tile_budget // (2 * S * Dp * esize))
        TB = min(TB, max(8, (tb_fit // 8) * 8))
        # TODO(synk): S-chunking grid axis (accumulator + pl.when init/finalize)
        # for shapes where even TB=8 exceeds the VMEM budget.

    # ---- cheap upstream batch padding: ids only -----------------------------
    B_pad = _round_up(B, TB)
    desc_p = desc if B_pad == B else jnp.pad(desc, ((0, B_pad - B), (0, 0)))
    # Token-weight gather is a tiny [B, S] stream (D-times smaller); leave to XLA.
    tok_w = jnp.take(weight_table[:, 0].astype(jnp.float32), desc_p, axis=0)
    grid = (B_pad // TB,)

    if fuse:
        out = pl.pallas_call(
            _fused_gather_kernel,
            out_shape=jax.ShapeDtypeStruct((B_pad, Dp), jnp.float32),
            grid_spec=pltpu.PrefetchScalarGridSpec(
                num_scalar_prefetch=1,
                grid=grid,
                in_specs=[
                    pl.BlockSpec((TB, S), lambda b, ids: (b, 0)),   # weights
                    pl.BlockSpec(memory_space=pl.ANY),              # table in HBM
                ],
                out_specs=pl.BlockSpec((TB, Dp), lambda b, ids: (b, 0)),
                scratch_shapes=[
                    pltpu.VMEM((2, S, Dp), emb.dtype),              # gather buf
                    pltpu.VMEM((TB, S), jnp.float32),               # softmax
                    pltpu.SemaphoreType.DMA((2,)),
                ]),
            compiler_params=pltpu.CompilerParams(
                dimension_semantics=("parallel",),
                vmem_limit_bytes=min(64 * 1024 * 1024, 3 * cap // 4)),
        )(desc_p.reshape(-1), tok_w, emb)
    else:
        tok_e = jnp.take(emb, desc_p, axis=0)                        # [B_pad, S, Dp]
        out = pl.pallas_call(
            _tile_kernel,
            out_shape=jax.ShapeDtypeStruct((B_pad, Dp), jnp.float32),
            grid=grid,
            in_specs=[
                pl.BlockSpec((TB, S), lambda b: (b, 0)),
                pl.BlockSpec((TB, S, Dp), lambda b: (b, 0, 0)),
            ],
            out_specs=pl.BlockSpec((TB, Dp), lambda b: (b, 0)),
            compiler_params=pltpu.CompilerParams(
                dimension_semantics=("parallel",),
                vmem_limit_bytes=min(96 * 1024 * 1024, 3 * cap // 4)),
        )(tok_w, tok_e)

    return out[:B, :D]


def _reference(desc, embed_table, weight_table):
    tok_e = jnp.take(embed_table, desc, axis=0).astype(jnp.float32)   # [B, S, D]
    tok_w = jnp.take(weight_table, desc, axis=0).astype(jnp.float32)  # [B, S, 1]
    nw = jax.nn.softmax(tok_w, axis=1)                                # [B, S, 1]
    return jnp.sum(nw * tok_e, axis=1)                                # [B, D]


if __name__ == "__main__":
    key = jax.random.PRNGKey(0)
    k_emb, k_w, k_desc = jax.random.split(key, 3)

    V, D = 64, 32      # vocab size, embedding dim
    B, S = 2, 8        # batch, sequence length

    # word_embeds: nn.Embedding(V, D) — standard normal init.
    embed_table = jax.random.normal(k_emb, (V, D), dtype=jnp.float32)

    # weights: nn.Embedding(V, 1) with xavier_normal_ init:
    #   std = gain * sqrt(2 / (fan_in + fan_out)) = sqrt(2 / (V + 1))
    xavier_std = (2.0 / (V + 1)) ** 0.5
    weight_table = xavier_std * jax.random.normal(k_w, (V, 1), dtype=jnp.float32)

    desc = jax.random.randint(k_desc, (B, S), 0, V, dtype=jnp.int32)

    out = weighted_sum_encoder(desc, embed_table, weight_table)
    out = jax.block_until_ready(out)

    ref = _reference(desc, embed_table, weight_table)
    assert out.shape == (B, D)
    # Tolerance covers the EUP approximate reciprocal (rel err ~1e-4) used for
    # the softmax denominator; everything else is exact f32.
    assert jnp.allclose(out, ref, atol=2e-3, rtol=2e-3), "mismatch vs reference"

    print("KERNEL_OK")
</pallas_src>

<mosaic_0001>
module attributes {stable_mosaic.version = 11 : i64} {
  func.func @_fused_gather_kernel(%arg0: i32, %arg1: memref<64xi32, #tpu.memory_space<smem>>, %arg2: memref<8x8xf32, #tpu.memory_space<vmem>>, %arg3: memref<64x128xf32, #tpu.memory_space<any>>, %arg4: memref<8x128xf32, #tpu.memory_space<vmem>>, %arg5: memref<2x8x128xf32, #tpu.memory_space<vmem>>, %arg6: memref<8x8xf32, #tpu.memory_space<vmem>>, %arg7: memref<2x!tpu.dma_semaphore, #tpu.memory_space<semaphore_mem>>) attributes {dimension_semantics = [#tpu.dimension_semantics<parallel>], iteration_bounds = array<i64: 1>, scalar_prefetch = 1 : i64, scratch_operands = 3 : i64, tpu.core_type = #tpu.core_type<tc>, window_params = [{transform_indices = @transform_0, window_bounds = array<i64: 8, 8>}, {}, {transform_indices = @transform_2, window_bounds = array<i64: 8, 128>}]} {
    %c8_i32 = arith.constant 8 : i32
    %0 = arith.muli %arg0, %c8_i32 : i32
    %c0_i32 = arith.constant 0 : i32
    %c8_i32_0 = arith.constant 8 : i32
    %1 = arith.addi %c0_i32, %c8_i32_0 : i32
    %c1_i32 = arith.constant 1 : i32
    scf.for %arg8 = %c0_i32 to %1 step %c1_i32  : i32 {
      %c1_i32_10 = arith.constant 1 : i32
      %15 = arith.muli %arg8, %c1_i32_10 : i32
      %c0_i32_11 = arith.constant 0 : i32
      %16 = arith.addi %c0_i32_11, %15 : i32
      %c0_i32_12 = arith.constant 0 : i32
      %17 = arith.addi %0, %c0_i32_12 : i32
      %c8_i32_13 = arith.constant 8 : i32
      %18 = arith.muli %17, %c8_i32_13 : i32
      %19 = arith.addi %18, %16 : i32
      %20 = arith.index_cast %19 : i32 to index
      %21 = memref.load %arg1[%20] : memref<64xi32, #tpu.memory_space<smem>>
      %c0_i32_14 = arith.constant 0 : i32
      %c0_i32_15 = arith.constant 0 : i32
      %c0_i32_16 = arith.constant 0 : i32
      %22 = tpu.memref_slice %arg3[%21, %c0_i32_16] : memref<64x128xf32, #tpu.memory_space<any>> -> memref<1x128xf32, #tpu.memory_space<any>>
      %23 = tpu.memref_squeeze %22 : memref<1x128xf32, #tpu.memory_space<any>> -> memref<128xf32, #tpu.memory_space<any>>
      %c0_i32_17 = arith.constant 0 : i32
      %24 = tpu.memref_slice %arg5[%c0_i32_14, %16, %c0_i32_17] : memref<2x8x128xf32, #tpu.memory_space<vmem>> -> memref<1x1x128xf32, #tpu.memory_space<vmem>>
      %25 = tpu.memref_squeeze %24 : memref<1x1x128xf32, #tpu.memory_space<vmem>> -> memref<128xf32, #tpu.memory_space<vmem>>
      %26 = tpu.memref_slice %arg7[%c0_i32_15] : memref<2x!tpu.dma_semaphore, #tpu.memory_space<semaphore_mem>> -> memref<1x!tpu.dma_semaphore, #tpu.memory_space<semaphore_mem>>
      %27 = tpu.memref_squeeze %26 : memref<1x!tpu.dma_semaphore, #tpu.memory_space<semaphore_mem>> -> memref<!tpu.dma_semaphore, #tpu.memory_space<semaphore_mem>>
      tpu.enqueue_dma source(%23 : memref<128xf32, #tpu.memory_space<any>>) target(%25 : memref<128xf32, #tpu.memory_space<vmem>>) target_semaphore(%27 : memref<!tpu.dma_semaphore, #tpu.memory_space<semaphore_mem>>)
    }
    %c8_i32_1 = arith.constant 8 : i32
    %c0 = arith.constant 0 : index
    %c0_2 = arith.constant 0 : index
    %2 = vector.load %arg2[%c0, %c0_2] : memref<8x8xf32, #tpu.memory_space<vmem>>, vector<8x8xf32>
    %cst = arith.constant dense<0xFF800000> : vector<8xf32>
    %3 = vector.multi_reduction <maximumf>, %2, %cst [1] : vector<8x8xf32> to vector<8xf32>
    %4 = vector.shape_cast %3 : vector<8xf32> to vector<8x1xf32>
    %5 = vector.broadcast %4 : vector<8x1xf32> to vector<8x8xf32>
    %6 = arith.subf %2, %5 : vector<8x8xf32>
    %7 = math.exp %6 : vector<8x8xf32>
    %cst_3 = arith.constant dense<0.000000e+00> : vector<8xf32>
    %8 = vector.multi_reduction <add>, %7, %cst_3 [1] : vector<8x8xf32> to vector<8xf32>
    %9 = vector.shape_cast %8 : vector<8xf32> to vector<8x1xf32>
    %10 = tpu.reciprocal %9 {approx = true} : vector<8x1xf32> -> vector<8x1xf32>
    %11 = vector.broadcast %10 : vector<8x1xf32> to vector<8x8xf32>
    %12 = arith.mulf %7, %11 : vector<8x8xf32>
    %c0_4 = arith.constant 0 : index
    %c0_5 = arith.constant 0 : index
    %13 = vector.load %arg6[%c0_4, %c0_5] : memref<8x8xf32, #tpu.memory_space<vmem>>, vector<8x8xf32>
    tpu.vector_store %arg6[%c0_4, %c0_5], %12 {strides = array<i32>} : memref<8x8xf32, #tpu.memory_space<vmem>>, vector<8x8xf32>,
    %c0_i32_6 = arith.constant 0 : i32
    %c8_i32_7 = arith.constant 8 : i32
    %14 = arith.addi %c0_i32_6, %c8_i32_7 : i32
    %c1_i32_8 = arith.constant 1 : i32
    scf.for %arg8 = %c0_i32_6 to %14 step %c1_i32_8  : i32 {
      %c1_i32_10 = arith.constant 1 : i32
      %15 = arith.muli %arg8, %c1_i32_10 : i32
      %c0_i32_11 = arith.constant 0 : i32
      %16 = arith.addi %c0_i32_11, %15 : i32
      %c1_i32_12 = arith.constant 1 : i32
      %17 = arith.andi %16, %c1_i32_12 : i32
      %c1_i32_13 = arith.constant 1 : i32
      %18 = arith.addi %16, %c1_i32_13 : i32
      %c8_i32_14 = arith.constant 8 : i32
      %19 = arith.cmpi slt, %18, %c8_i32_14 : i32
      %20 = arith.extui %19 : i1 to i32
      %c0_i32_15 = arith.constant 0 : i32
      %21 = arith.cmpi ne, %20, %c0_i32_15 : i32
      scf.if %21 {
        %c1_i32_25 = arith.constant 1 : i32
        %31 = arith.addi %16, %c1_i32_25 : i32
        %c1_i32_26 = arith.constant 1 : i32
        %32 = arith.subi %c1_i32_26, %17 : i32
        %c0_i32_27 = arith.constant 0 : i32
        %c8_i32_28 = arith.constant 8 : i32
        %33 = arith.addi %c0_i32_27, %c8_i32_28 : i32
        %c1_i32_29 = arith.constant 1 : i32
        scf.for %arg9 = %c0_i32_27 to %33 step %c1_i32_29  : i32 {
          %c1_i32_31 = arith.constant 1 : i32
          %34 = arith.muli %arg9, %c1_i32_31 : i32
          %c0_i32_32 = arith.constant 0 : i32
          %35 = arith.addi %c0_i32_32, %34 : i32
          %36 = arith.addi %0, %31 : i32
          %c8_i32_33 = arith.constant 8 : i32
          %37 = arith.muli %36, %c8_i32_33 : i32
          %38 = arith.addi %37, %35 : i32
          %39 = arith.index_cast %38 : i32 to index
          %40 = memref.load %arg1[%39] : memref<64xi32, #tpu.memory_space<smem>>
          %c0_i32_34 = arith.constant 0 : i32
          %41 = tpu.memref_slice %arg3[%40, %c0_i32_34] : memref<64x128xf32, #tpu.memory_space<any>> -> memref<1x128xf32, #tpu.memory_space<any>>
          %42 = tpu.memref_squeeze %41 : memref<1x128xf32, #tpu.memory_space<any>> -> memref<128xf32, #tpu.memory_space<any>>
          %c0_i32_35 = arith.constant 0 : i32
          %43 = tpu.memref_slice %arg5[%32, %35, %c0_i32_35] : memref<2x8x128xf32, #tpu.memory_space<vmem>> -> memref<1x1x128xf32, #tpu.memory_space<vmem>>
          %44 = tpu.memref_squeeze %43 : memref<1x1x128xf32, #tpu.memory_space<vmem>> -> memref<128xf32, #tpu.memory_space<vmem>>
          %45 = tpu.memref_slice %arg7[%32] : memref<2x!tpu.dma_semaphore, #tpu.memory_space<semaphore_mem>> -> memref<1x!tpu.dma_semaphore, #tpu.memory_space<semaphore_mem>>
          %46 = tpu.memref_squeeze %45 : memref<1x!tpu.dma_semaphore, #tpu.memory_space<semaphore_mem>> -> memref<!tpu.dma_semaphore, #tpu.memory_space<semaphore_mem>>
          tpu.enqueue_dma source(%42 : memref<128xf32, #tpu.memory_space<any>>) target(%44 : memref<128xf32, #tpu.memory_space<vmem>>) target_semaphore(%46 : memref<!tpu.dma_semaphore, #tpu.memory_space<semaphore_mem>>)
        }
        %c8_i32_30 = arith.constant 8 : i32
      } else {
      }
      %c0_i32_16 = arith.constant 0 : i32
      %c8_i32_17 = arith.constant 8 : i32
      %22 = arith.addi %c0_i32_16, %c8_i32_17 : i32
      %c1_i32_18 = arith.constant 1 : i32
      scf.for %arg9 = %c0_i32_16 to %22 step %c1_i32_18  : i32 {
        %c1_i32_25 = arith.constant 1 : i32
        %31 = arith.muli %arg9, %c1_i32_25 : i32
        %c0_i32_26 = arith.constant 0 : i32
        %32 = arith.addi %c0_i32_26, %31 : i32
        %c0_i32_27 = arith.constant 0 : i32
        %c0_i32_28 = arith.constant 0 : i32
        %33 = tpu.memref_slice %arg3[%c0_i32_27, %c0_i32_28] : memref<64x128xf32, #tpu.memory_space<any>> -> memref<1x128xf32, #tpu.memory_space<any>>
        %34 = tpu.memref_squeeze %33 : memref<1x128xf32, #tpu.memory_space<any>> -> memref<128xf32, #tpu.memory_space<any>>
        %c0_i32_29 = arith.constant 0 : i32
        %35 = tpu.memref_slice %arg5[%17, %32, %c0_i32_29] : memref<2x8x128xf32, #tpu.memory_space<vmem>> -> memref<1x1x128xf32, #tpu.memory_space<vmem>>
        %36 = tpu.memref_squeeze %35 : memref<1x1x128xf32, #tpu.memory_space<vmem>> -> memref<128xf32, #tpu.memory_space<vmem>>
        %37 = tpu.memref_slice %arg7[%17] : memref<2x!tpu.dma_semaphore, #tpu.memory_space<semaphore_mem>> -> memref<1x!tpu.dma_semaphore, #tpu.memory_space<semaphore_mem>>
        %38 = tpu.memref_squeeze %37 : memref<1x!tpu.dma_semaphore, #tpu.memory_space<semaphore_mem>> -> memref<!tpu.dma_semaphore, #tpu.memory_space<semaphore_mem>>
        tpu.wait_dma2 semaphore(%38 : memref<!tpu.dma_semaphore, #tpu.memory_space<semaphore_mem>>) src(%34 : memref<128xf32, #tpu.memory_space<any>>) dst(%36 : memref<128xf32, #tpu.memory_space<vmem>>)
      }
      %c8_i32_19 = arith.constant 8 : i32
      %23 = arith.index_cast %17 : i32 to index
      %c0_20 = arith.constant 0 : index
      %c0_21 = arith.constant 0 : index
      %24 = vector.load %arg5[%23, %c0_20, %c0_21] : memref<2x8x128xf32, #tpu.memory_space<vmem>>, vector<1x8x128xf32>
      %25 = vector.shape_cast %24 : vector<1x8x128xf32> to vector<8x128xf32>
      %26 = arith.index_cast %16 : i32 to index
      %c0_22 = arith.constant 0 : index
      %27 = vector.load %arg6[%26, %c0_22] : memref<8x8xf32, #tpu.memory_space<vmem>>, vector<1x8xf32>
      %cst_23 = arith.constant dense<0.000000e+00> : vector<1x128xf32>
      %28 = tpu.matmul %27, %25, %cst_23 {dimension_numbers = #tpu.dot_dimension_numbers<[1], [0], [0], [1], [0, 0, 1, 1], [], []>} : vector<1x8xf32>, vector<8x128xf32>, vector<1x128xf32> -> vector<1x128xf32>
      %29 = arith.index_cast %16 : i32 to index
      %c0_24 = arith.constant 0 : index
      %30 = vector.load %arg4[%29, %c0_24] : memref<8x128xf32, #tpu.memory_space<vmem>>, vector<1x128xf32>
      tpu.vector_store %arg4[%29, %c0_24], %28 {strides = array<i32>} : memref<8x128xf32, #tpu.memory_space<vmem>>, vector<1x128xf32>,
    }
    %c8_i32_9 = arith.constant 8 : i32
    return
  }
  func.func @transform_0(%arg0: i32, %arg1: memref<64xi32, #tpu.memory_space<smem>>) -> (i32, i32) {
    %c0_i32 = arith.constant 0 : i32
    %c0_i32_0 = arith.constant 0 : i32
    return %arg0, %c0_i32 : i32, i32
  }
  func.func @transform_2(%arg0: i32, %arg1: memref<64xi32, #tpu.memory_space<smem>>) -> (i32, i32) {
    %c0_i32 = arith.constant 0 : i32
    %c0_i32_0 = arith.constant 0 : i32
    return %arg0, %c0_i32 : i32, i32
  }
}

</mosaic_0001>

<llo_original>
// kernel: tpu_custom_call.1
$region0: #{tpu_custom_call.1}
  #allocation0 [shape = 'u32[]', space=smem, size = 0x4, offset = 0x4, fixed_abs, tag = 'smem constant byte address 0x4 - core index']
  #allocation1 [shape = 'u32[72,128]{1,0:T(1,128)}', space=vmem, size = 0x9000, scoped, tag = 'internal scratch']
  #allocation2 [shape = 'f32[2,8,128]{2,1,0:T(8,128)}', space=vmem, size = 0x2000, scoped, tag = 'scratch operand']
  #allocation3 [shape = 'f32[8,8]{1,0:T(8,128)}', space=vmem, size = 0x1000, scoped, tag = 'scratch operand']
  #allocation4 [shape = 's32[2]{0}', space=sflag, size = 0x8, scoped, tag = 'scratch operand']
  #allocation5 [shape = 's32[1]{0}', space=sflag, size = 0x4, scoped, tag = 'scoped memory for tpu_custom_call.1']
  #allocation6 [shape = 'u8[512]{0}', space=smem, size = 0x200, scoped, tag = 'prefetched SMEM operand 0']
  #allocation11 [shape = 's32[]', space=sflag, size = 0x4, offset = 0, fixed_abs, tag = 'sflag constant byte address 0x0 - dummy sync flag']
  #allocation12 [shape = 's32[]', space=sflag, size = 0x4, offset = 0, fixed_abs, tag = 'sflag constant byte address 0x0 - dummy sync flag']
  #allocation13 [shape = 'u32[]', space=smem, size = 0x4, offset = 0x44, fixed_abs, tag = 'smem constant byte address 0x44 - assertion arg 0']
  #allocation14 [shape = 'u32[]', space=smem, size = 0x4, offset = 0x48, fixed_abs, tag = 'smem constant byte address 0x48 - assertion arg 1']
  #allocation15 [shape = 's32[]', space=sflag, size = 0x4, offset = 0, fixed_abs, tag = 'sflag constant byte address 0x0 - dummy sync flag']
  #allocation16 [shape = 's32[]', space=sflag, size = 0x4, offset = 0, fixed_abs, tag = 'sflag constant byte address 0x0 - dummy sync flag']
  %s0 = inlined_call_operand.hbm [shape: s32[64], index: 0, kind: input, shape index: {}]
  %s1 = inlined_call_operand.hbm [shape: f32[8,8], index: 1, kind: input, shape index: {}]
  %s2 = inlined_call_operand.hbm [shape: f32[64,128], index: 2, kind: input, shape index: {}]
  %s3 = inlined_call_operand.hbm [shape: f32[8,128], index: 3, kind: output, shape index: {}]
  %s4 = sld [smem:[#allocation0]]
  $region58: #{tpu_custom_call.1} parent=0
    _
  %s6 = ssub.s32 1, %s4
  %s7 = scalar_select 0, %s6, %s4
  %s9 = sshll.u32 %s0, 4
  %s10 = int_to_ptr.hbm [resolvable:$true] %s9
  %12 = dma.hbm_to_smem %s10, 16, [#allocation6], [#allocation5]
  %14 = dma.done [#allocation5], 16
  %15 = sfence
  $region1: #{tpu_custom_call.1} parent=0
    #allocation7 [shape = 'u8[4096]{0}', space=vmem, size = 0x1000, scoped, tag = 'input window, operand 1, single buffered']
    #allocation8 [shape = 's32[1]{0}', space=sflag, size = 0x4, scoped, tag = 'scoped memory for tpu_custom_call.1']
    #allocation9 [shape = 's32[1]{0}', space=sflag, size = 0x4, scoped, tag = 'scoped memory for tpu_custom_call.1']
    #allocation10 [shape = 'u8[4096]{0}', space=vmem, size = 0x1000, scoped, tag = 'output window, operand 0, single buffered']
    %16 = vsyncpa [#allocation8], 0
    %17 = vsyncpa [#allocation9], 0
    // Predicated region
    $region2: #{tpu_custom_call.1} parent=1 // pred_check
      _
    $region3: #{tpu_custom_call.1} parent=1 // pred_check_branch
      %19 = sbr.rel (0) target = $region5
    $region4: #{tpu_custom_call.1} parent=1 // pred_region
      %21 = vsyncadd [#allocation8], 0
      %s23 = sshll.u32 %s1, 4
      %s24 = int_to_ptr.hbm [resolvable:$true] %s23
      %s25 = sshll.u32 [#allocation7], 4
      %s26 = int_to_ptr.vmem [resolvable:$true] %s25
      %28 = dma.hbm_to_vmem [thread:$0]  %s24, 128, %s26, [#allocation8]
    $region5: #{tpu_custom_call.1} parent=1 // pred_fallthru
      _
    // Predicated region
    $region6: #{tpu_custom_call.1} parent=1 // pred_check
      _
    $region7: #{tpu_custom_call.1} parent=1 // pred_check_branch
      %30 = sbr.rel (0) target = $region9
    $region8: #{tpu_custom_call.1} parent=1 // pred_region
      %32 = dma.done [#allocation8], 128
    $region9: #{tpu_custom_call.1} parent=1 // pred_fallthru
      _
    %s33 = smul.u32 0, 8
    loop: start=0, step=1, limit=8
    $region10: #{tpu_custom_call.1} parent=1 // loop_pre_header
      _
    $region11: #{tpu_custom_call.1} parent=1 // loop_header
      %s35 = sphi 0, %s39
      %p36 = scmp.ge.s32.totalorder %s35, 8
    $region12: #{tpu_custom_call.1} parent=1 // loop_header_branch
      %38 = sbr.rel (%p36) target = $region16
    $region13: #{tpu_custom_call.1} parent=1 // loop_body
      %s40 = smul.u32 0, 64
      %s41 = sadd.s32 %s40, %s35
      %s42 = sld [smem:[#allocation6 + %s41]]
      %s43 = scalar_lea.hbm %s2, %s42
      %s44 = scalar_lea.vmem [#allocation2], %s35
      // Predicated region
      $region17: #{tpu_custom_call.1} parent=13 // pred_check
        _
      $region18: #{tpu_custom_call.1} parent=13 // pred_check_branch
        %46 = sbr.rel target = $region20
      $region19: #{tpu_custom_call.1} parent=13 // pred_region
        %47 = sst [smem:[#allocation13]] [#allocation12]
        %48 = sst [smem:[#allocation14]] [#allocation11]
      $region20: #{tpu_custom_call.1} parent=13 // pred_fallthru
        _
      %50 = shalt.err (0)
      %s52 = sshll.u32 %s43, 4
      %s53 = int_to_ptr.hbm [resolvable:$true] %s52
      %s54 = sshll.u32 %s44, 4
      %s55 = int_to_ptr.vmem [resolvable:$true] %s54
      %57 = dma.hbm_to_vmem [thread:$0]  %s53, 16, %s55, [#allocation4]
    $region14: #{tpu_custom_call.1} parent=1 // loop_footer
      %s39 = sadd.s32 1, %s35
    $region15: #{tpu_custom_call.1} parent=1 // loop_footer_branch
      %34 = sbr.rel target = $region11
    $region16: #{tpu_custom_call.1} parent=1 // loop_exit
      _
    %v58 = vld [vmem:[#allocation7] sm:$0xff]
    %vm59 = vcmask 64512
    %v60 = vsel %vm59, %v58, -inf
    %61 = vmax.xlane.f32.xlu0 %v60
    %v62 = vpop.xlane.xlu0 %61
    %v63 = vsub.f32 %v58, %v62
    %v64 = vmul.f32 %v63, 1.442695
    %v65 = vpow.pop %v64
    %v66 = vsel %vm59, %v65, 0.0
    %67 = vadd.xlane.f32.xlu0 %v66
    %v68 = vpop.xlane.xlu0 %67
    %v69 = vrcp.pop %v68
    %v70 = vmul.f32 %v65, %v69
    %71 = vst.msk [vmem:[#allocation3] sm:$0xff] %vm59, %v70
    loop: start=0, step=1, limit=8
    $region21: #{tpu_custom_call.1} parent=1 // loop_pre_header
      _
    $region22: #{tpu_custom_call.1} parent=1 // loop_header
      %s73 = sphi 0, %s77
      %p74 = scmp.ge.s32.totalorder %s73, 8
    $region23: #{tpu_custom_call.1} parent=1 // loop_header_branch
      %76 = sbr.rel (%p74) target = $region27
    $region24: #{tpu_custom_call.1} parent=1 // loop_body
      %s78 = sand.u32 %s73, 1
      %s79 = sadd.s32 %s73, 1
      %p80 = scmp.lt.s32.totalorder %s79, 8
      // Predicated region
      $region28: #{tpu_custom_call.1} parent=24 // pred_check
        %p81 = pneg %p80
      $region29: #{tpu_custom_call.1} parent=24 // pred_check_branch
        %83 = sbr.rel (%p81) target = $region31
      $region30: #{tpu_custom_call.1} parent=24 // pred_region
        %s84 = ssub.s32 1, %s78
        loop: start=0, step=1, limit=8
        $region32: #{tpu_custom_call.1} parent=30 // loop_pre_header
          _
        $region33: #{tpu_custom_call.1} parent=30 // loop_header
          %s86 = sphi 0, %s90
          %p87 = scmp.ge.s32.totalorder %s86, 8
        $region34: #{tpu_custom_call.1} parent=30 // loop_header_branch
          %89 = sbr.rel (%p87) target = $region38
        $region35: #{tpu_custom_call.1} parent=30 // loop_body
          %s91 = sadd.s32 %s33, %s79
          %s92 = smul.u32 %s91, 8
          %s93 = sadd.s32 %s92, %s86
          %s94 = sld [smem:[#allocation6 + %s93]]
          %s95 = scalar_lea.hbm %s2, %s94
          %s96 = smul.u32 %s84, 8
          %s97 = sadd.s32 %s86, %s96
          %s98 = scalar_lea.vmem [#allocation2], %s97
          %s99 = scalar_lea.sflag [#allocation4], %s84
          // Predicated region
          $region39: #{tpu_custom_call.1} parent=35 // pred_check
            _
          $region40: #{tpu_custom_call.1} parent=35 // pred_check_branch
            %101 = sbr.rel target = $region42
          $region41: #{tpu_custom_call.1} parent=35 // pred_region
            %102 = sst [smem:[#allocation13]] [#allocation16]
            %103 = sst [smem:[#allocation14]] [#allocation15]
          $region42: #{tpu_custom_call.1} parent=35 // pred_fallthru
            _
          %105 = shalt.err (0)
          %s107 = sshll.u32 %s95, 4
          %s108 = int_to_ptr.hbm [resolvable:$true] %s107
          %s109 = sshll.u32 %s98, 4
          %s110 = int_to_ptr.vmem [resolvable:$true] %s109
          %112 = dma.hbm_to_vmem [thread:$0]  %s108, 16, %s110, %s99
        $region36: #{tpu_custom_call.1} parent=30 // loop_footer
          %s90 = sadd.s32 1, %s86
        $region37: #{tpu_custom_call.1} parent=30 // loop_footer_branch
          %85 = sbr.rel target = $region33
        $region38: #{tpu_custom_call.1} parent=30 // loop_exit
          _
      $region31: #{tpu_custom_call.1} parent=24 // pred_fallthru
        _
      loop: start=0, step=1, limit=8
      $region43: #{tpu_custom_call.1} parent=24 // loop_pre_header
        _
      $region44: #{tpu_custom_call.1} parent=24 // loop_header
        %s114 = sphi 0, %s118
        %p115 = scmp.ge.s32.totalorder %s114, 8
      $region45: #{tpu_custom_call.1} parent=24 // loop_header_branch
        %117 = sbr.rel (%p115) target = $region49
      $region46: #{tpu_custom_call.1} parent=24 // loop_body
        %s119 = scalar_lea.sflag [#allocation4], %s78
        %121 = dma.done %s119, 16
      $region47: #{tpu_custom_call.1} parent=24 // loop_footer
        %s118 = sadd.s32 1, %s114
      $region48: #{tpu_custom_call.1} parent=24 // loop_footer_branch
        %113 = sbr.rel target = $region44
      $region49: #{tpu_custom_call.1} parent=24 // loop_exit
        _
      %s122 = smul.u32 %s78, 8
      %s123 = scalar_lea.vmem [#allocation2], %s122
      %v124 = vld [vmem:[%s123] sm:$0xff]
      %s125 = scalar_lea.vmem [#allocation3], %s73
      %v126 = vld [vmem:[%s125] sm:$0x1]
      %v128 = vsel %vm59, %v126, 0
      %130 = vmatpush.msra.mxu0 0.0
      %131 = vmatpush.msra.mxu0 0.0
      %132 = vmatpush.msra.mxu0 0.0
      %133 = vmatpush.msra.mxu0 0.0
      %134 = vmatpush.msra.mxu0 0.0
      %135 = vmatpush.msra.mxu0 0.0
      %136 = vmatpush.msra.mxu0 0.0
      %137 = vmatpush.msra.mxu0 0.0
      %138 = vmatpush.msra.mxu0 0.0
      %139 = vmatpush.msra.mxu0 0.0
      %140 = vmatpush.msra.mxu0 0.0
      %141 = vmatpush.msra.mxu0 0.0
      %142 = vmatpush.msra.mxu0 0.0
      %143 = vmatpush.msra.mxu0 0.0
      %144 = vmatpush.msra.mxu0 0.0
      %145 = vmatpush.msra.mxu0 %v124
      %146 = vmatmul.f32.gmra.mxu0 %v128
      %v147 = vpop.f32.mrf.mxu0
      %v148 = vadd.f32 0.0, %v147
      %149 = vdwg.mxu0
      %s150 = scalar_lea.vmem [#allocation10], %s73
      %151 = vst [vmem:[%s150] sm:$0x1] %v148
    $region25: #{tpu_custom_call.1} parent=1 // loop_footer
      %s77 = sadd.s32 1, %s73
    $region26: #{tpu_custom_call.1} parent=1 // loop_footer_branch
      %72 = sbr.rel target = $region22
    $region27: #{tpu_custom_call.1} parent=1 // loop_exit
      _
    // Predicated region
    $region50: #{tpu_custom_call.1} parent=1 // pred_check
      _
    $region51: #{tpu_custom_call.1} parent=1 // pred_check_branch
      %153 = sbr.rel (0) target = $region53
    $region52: #{tpu_custom_call.1} parent=1 // pred_region
      %155 = vsyncadd [#allocation9], 0
      %s157 = sshll.u32 [#allocation10], 4
      %s158 = int_to_ptr.vmem [resolvable:$true] %s157
      %s159 = sshll.u32 %s3, 4
      %s160 = int_to_ptr.hbm [resolvable:$true] %s159
      %162 = dma.vmem_to_hbm [thread:$0]  %s158, 128, %s160, [#allocation9]
    $region53: #{tpu_custom_call.1} parent=1 // pred_fallthru
      _
    // Predicated region
    $region54: #{tpu_custom_call.1} parent=1 // pred_check
      _
    $region55: #{tpu_custom_call.1} parent=1 // pred_check_branch
      %164 = sbr.rel (0) target = $region57
    $region56: #{tpu_custom_call.1} parent=1 // pred_region
      %166 = dma.done [#allocation9], 128
    $region57: #{tpu_custom_call.1} parent=1 // pred_fallthru
      _
    %167 = vsyncpa [#allocation8], 1
    %168 = vsyncpa [#allocation9], 1
  %169 = vsyncmov [#allocation4]
  %s170 = vpop.sfrf %169
  %p171 = scmp.eq.s32.totalorder %s170, 0
  %p172 = pneg %p171
  %174 = shalt.err (%p172)
  %s175 = scalar_lea.sflag [#allocation4], 1
  %176 = vsyncmov %s175
  %s177 = vpop.sfrf %176
  %p178 = scmp.eq.s32.totalorder %s177, 0
  %p179 = pneg %p178
  %181 = shalt.err (%p179)

</llo_original>
